<compile_context>
chip_gen: v7x
topology: tpu7x:2x2x1
jax: 0.10.0
libtpu: 0.0.40
codegen_flags: <defaults>
</compile_context>

<pallas_src>
import jax
import jax.numpy as jnp
from jax.experimental import pallas as pl
from jax.experimental.pallas import tpu as pltpu


NEG_SLOPE = 0.01   # nn.LeakyReLU default
LN_EPS = 1e-5      # nn.LayerNorm default
LANE = 128


def _round_up(n, m):
    return (n + m - 1) // m * m


def _layernorm_f32(h, gamma, beta):
    # Two-pass variance: numerically safe vs E[h^2] - E[h]^2.
    mu = jnp.mean(h, axis=-1, keepdims=True)
    d = h - mu
    var = jnp.mean(d * d, axis=-1, keepdims=True)
    return d * jax.lax.rsqrt(var + LN_EPS) * gamma + beta


def _leaky_relu(h):
    return jnp.where(h >= 0, h, NEG_SLOPE * h)


def dqn_kernel(x_ref,
               w1_ref, b1_ref, g1_ref, be1_ref,
               w2_ref, b2_ref, g2_ref, be2_ref,
               w3_ref, b3_ref,
               o_ref):
    # --- Layer 1: Linear(in,256) + LayerNorm + LeakyReLU (Dropout = identity) ---
    # x arrives as f32 straight from HBM; cast to bf16 on the VPU (hidden under
    # the DMA/MXU work) instead of a separate wrapper pass.
    xb = x_ref[...].astype(jnp.bfloat16)
    h = jnp.dot(xb, w1_ref[...], preferred_element_type=jnp.float32)
    h = h + b1_ref[...]
    h = _leaky_relu(_layernorm_f32(h, g1_ref[...], be1_ref[...]))

    # --- Layer 2: Linear(256,128) + LayerNorm + LeakyReLU (Dropout = identity) ---
    h = jnp.dot(h.astype(jnp.bfloat16), w2_ref[...],
                preferred_element_type=jnp.float32)
    h = h + b2_ref[...]
    h = _leaky_relu(_layernorm_f32(h, g2_ref[...], be2_ref[...]))

    # --- Output head: Linear(128, out) padded to a lane-dense 128-wide block ---
    o = jnp.dot(h.astype(jnp.bfloat16), w3_ref[...],
                preferred_element_type=jnp.float32)
    o_ref[...] = (o + b3_ref[...]).astype(o_ref.dtype)   # bf16 writeback stream


def _resident_spec(arr):
    # Full-shape block, constant index_map: fetched once, stays resident in VMEM.
    index_map = lambda i: (0,) * arr.ndim
    try:
        # Constant blocks never change across the grid -> single buffer (no
        # wasted second buffer / revisit-DMA bookkeeping).
        return pl.BlockSpec(arr.shape, index_map, pipeline_mode=pl.Buffered(1))
    except (TypeError, AttributeError):
        return pl.BlockSpec(arr.shape, index_map)


def dqn_forward(x, params, *, tb_max=2048, min_tiles=2):
    """x: [B, input_dim] float32; params: dict from init_params (f32, logical shapes).

    Returns [B, output_dim] float32 Q-values (computed bf16-out in-kernel,
    upcast here)."""
    B, in_dim = x.shape
    out_dim = params["w3"].shape[1]
    out_pad = _round_up(out_dim, LANE)

    # --- Batch tiling: minimize padding, amortize per-step overhead. ---
    b8 = _round_up(B, 8)
    n_tiles = max(pl.cdiv(b8, int(tb_max)), 1)
    # v7x has 2 TensorCores; with dimension_semantics=("parallel",) a grid of 1
    # strands one of them. Split when there is enough batch to split.
    if n_tiles < min_tiles and b8 >= 8 * min_tiles:
        n_tiles = min_tiles
    tb = _round_up(pl.cdiv(b8, n_tiles), 8)
    b_pad = n_tiles * tb

    # Only materialize a padded copy when actually needed (no cast pass: x stays f32).
    if b_pad != B:
        xp = jnp.zeros((b_pad, in_dim), x.dtype).at[:B, :].set(x)
    else:
        xp = x

    # Resident weights: bf16 matmul operands, f32 bias/LN params.
    w1 = params["w1"].astype(jnp.bfloat16)
    w2 = params["w2"].astype(jnp.bfloat16)
    w3 = jnp.zeros((params["w3"].shape[0], out_pad), jnp.bfloat16)
    w3 = w3.at[:, :out_dim].set(params["w3"].astype(jnp.bfloat16))
    b3 = jnp.zeros((1, out_pad), jnp.float32).at[:, :out_dim].set(params["b3"])

    operands = (
        xp,
        w1, params["b1"], params["g1"], params["be1"],
        w2, params["b2"], params["g2"], params["be2"],
        w3, b3,
    )

    in_specs = [pl.BlockSpec((tb, in_dim), lambda i: (i, 0))] + \
               [_resident_spec(a) for a in operands[1:]]
    out_spec = pl.BlockSpec((tb, out_pad), lambda i: (i, 0))

    out = pl.pallas_call(
        dqn_kernel,
        out_shape=jax.ShapeDtypeStruct((b_pad, out_pad), jnp.bfloat16),
        grid_spec=pltpu.PrefetchScalarGridSpec(
            num_scalar_prefetch=0,
            grid=(n_tiles,),
            in_specs=in_specs,
            out_specs=out_spec,
        ),
        compiler_params=pltpu.CompilerParams(
            dimension_semantics=("parallel",),     # megacore-shardable batch axis
            vmem_limit_bytes=32 * 1024 * 1024,     # covers tb_max=2048 on v5e too
        ),
    )(*operands)

    return out[:B, :out_dim].astype(jnp.float32)


def init_params(key, input_dim, output_dim):
    """Deterministic synthetic init (shapes match the PyTorch module, stored f32)."""
    ks = jax.random.split(key, 6)

    def lin(kw, kb, fan_in, fan_out):
        bound = 1.0 / jnp.sqrt(fan_in)
        w = jax.random.uniform(kw, (fan_in, fan_out), jnp.float32, -bound, bound)
        b = jax.random.uniform(kb, (1, fan_out), jnp.float32, -bound, bound)
        return w, b

    w1, b1 = lin(ks[0], ks[1], input_dim, 256)
    w2, b2 = lin(ks[2], ks[3], 256, 128)
    w3, b3 = lin(ks[4], ks[5], 128, output_dim)

    return {
        "w1": w1, "b1": b1,
        "g1": jnp.ones((1, 256), jnp.float32), "be1": jnp.zeros((1, 256), jnp.float32),
        "w2": w2, "b2": b2,
        "g2": jnp.ones((1, 128), jnp.float32), "be2": jnp.zeros((1, 128), jnp.float32),
        "w3": w3, "b3": b3,
    }


def dqn_forward_ref(x, p):
    """Pure-JAX reference with the same bf16-matmul / f32-accumulate / bf16-out policy."""
    bf = jnp.bfloat16
    h = jnp.dot(x.astype(bf), p["w1"].astype(bf),
                preferred_element_type=jnp.float32) + p["b1"]
    h = _leaky_relu(_layernorm_f32(h, p["g1"], p["be1"]))
    h = jnp.dot(h.astype(bf), p["w2"].astype(bf),
                preferred_element_type=jnp.float32) + p["b2"]
    h = _leaky_relu(_layernorm_f32(h, p["g2"], p["be2"]))
    o = jnp.dot(h.astype(bf), p["w3"].astype(bf),
                preferred_element_type=jnp.float32) + p["b3"]
    return o.astype(bf).astype(jnp.float32)


if __name__ == "__main__":
    key = jax.random.PRNGKey(0)
    k_x, k_x2, k_p = jax.random.split(key, 3)

    batch = 8
    input_dim = 32
    output_dim = 4

    params = init_params(k_p, input_dim, output_dim)

    # Single-tile case (grid = 1, no padding copy).
    x = jax.random.normal(k_x, (batch, input_dim), jnp.float32)
    out = jax.block_until_ready(dqn_forward(x, params))
    ref = dqn_forward_ref(x, params)
    assert out.shape == (batch, output_dim)
    assert jnp.allclose(out, ref, atol=1e-2, rtol=1e-2), "mismatch vs JAX reference"

    # Multi-tile case (grid > 1, batch padding exercised, tiny tile override).
    batch2 = 20
    x2 = jax.random.normal(k_x2, (batch2, input_dim), jnp.float32)
    out2 = jax.block_until_ready(dqn_forward(x2, params, tb_max=8))
    ref2 = dqn_forward_ref(x2, params)
    assert out2.shape == (batch2, output_dim)
    assert jnp.allclose(out2, ref2, atol=1e-2, rtol=1e-2), "mismatch (tiled) vs JAX reference"

    print("KERNEL_OK")
</pallas_src>

<mosaic_0001>
module attributes {stable_mosaic.version = 11 : i64} {
  func.func @dqn_kernel(%arg0: i32, %arg1: memref<8x32xf32, #tpu.memory_space<vmem>>, %arg2: memref<32x256xbf16, #tpu.memory_space<vmem>>, %arg3: memref<1x256xf32, #tpu.memory_space<vmem>>, %arg4: memref<1x256xf32, #tpu.memory_space<vmem>>, %arg5: memref<1x256xf32, #tpu.memory_space<vmem>>, %arg6: memref<256x128xbf16, #tpu.memory_space<vmem>>, %arg7: memref<1x128xf32, #tpu.memory_space<vmem>>, %arg8: memref<1x128xf32, #tpu.memory_space<vmem>>, %arg9: memref<1x128xf32, #tpu.memory_space<vmem>>, %arg10: memref<128x128xbf16, #tpu.memory_space<vmem>>, %arg11: memref<1x128xf32, #tpu.memory_space<vmem>>, %arg12: memref<8x128xbf16, #tpu.memory_space<vmem>>) attributes {dimension_semantics = [#tpu.dimension_semantics<parallel>], iteration_bounds = array<i64: 1>, scalar_prefetch = 0 : i64, scratch_operands = 0 : i64, tpu.core_type = #tpu.core_type<tc>, window_params = [{transform_indices = @transform_0, window_bounds = array<i64: 8, 32>}, {pipeline_mode = #tpu.pipeline_mode<synchronous>, transform_indices = @transform_1, window_bounds = array<i64: 32, 256>}, {pipeline_mode = #tpu.pipeline_mode<synchronous>, transform_indices = @transform_2, window_bounds = array<i64: 1, 256>}, {pipeline_mode = #tpu.pipeline_mode<synchronous>, transform_indices = @transform_3, window_bounds = array<i64: 1, 256>}, {pipeline_mode = #tpu.pipeline_mode<synchronous>, transform_indices = @transform_4, window_bounds = array<i64: 1, 256>}, {pipeline_mode = #tpu.pipeline_mode<synchronous>, transform_indices = @transform_5, window_bounds = array<i64: 256, 128>}, {pipeline_mode = #tpu.pipeline_mode<synchronous>, transform_indices = @transform_6, window_bounds = array<i64: 1, 128>}, {pipeline_mode = #tpu.pipeline_mode<synchronous>, transform_indices = @transform_7, window_bounds = array<i64: 1, 128>}, {pipeline_mode = #tpu.pipeline_mode<synchronous>, transform_indices = @transform_8, window_bounds = array<i64: 1, 128>}, {pipeline_mode = #tpu.pipeline_mode<synchronous>, transform_indices = @transform_9, window_bounds = array<i64: 128, 128>}, {pipeline_mode = #tpu.pipeline_mode<synchronous>, transform_indices = @transform_10, window_bounds = array<i64: 1, 128>}, {transform_indices = @transform_11, window_bounds = array<i64: 8, 128>}]} {
    %c0 = arith.constant 0 : index
    %c0_0 = arith.constant 0 : index
    %0 = vector.load %arg1[%c0, %c0_0] : memref<8x32xf32, #tpu.memory_space<vmem>>, vector<8x32xf32>
    %1 = arith.truncf %0 : vector<8x32xf32> to vector<8x32xbf16>
    %c0_1 = arith.constant 0 : index
    %c0_2 = arith.constant 0 : index
    %2 = vector.load %arg2[%c0_1, %c0_2] : memref<32x256xbf16, #tpu.memory_space<vmem>>, vector<32x256xbf16>
    %cst = arith.constant dense<0.000000e+00> : vector<8x256xf32>
    %3 = tpu.matmul %1, %2, %cst {dimension_numbers = #tpu.dot_dimension_numbers<[1], [0], [0], [1], [0, 0, 1, 1], [], []>} : vector<8x32xbf16>, vector<32x256xbf16>, vector<8x256xf32> -> vector<8x256xf32>
    %c0_3 = arith.constant 0 : index
    %c0_4 = arith.constant 0 : index
    %4 = vector.load %arg3[%c0_3, %c0_4] : memref<1x256xf32, #tpu.memory_space<vmem>>, vector<1x256xf32>
    %5 = vector.broadcast %4 : vector<1x256xf32> to vector<8x256xf32>
    %6 = arith.addf %3, %5 : vector<8x256xf32>
    %c0_5 = arith.constant 0 : index
    %c0_6 = arith.constant 0 : index
    %7 = vector.load %arg4[%c0_5, %c0_6] : memref<1x256xf32, #tpu.memory_space<vmem>>, vector<1x256xf32>
    %c0_7 = arith.constant 0 : index
    %c0_8 = arith.constant 0 : index
    %8 = vector.load %arg5[%c0_7, %c0_8] : memref<1x256xf32, #tpu.memory_space<vmem>>, vector<1x256xf32>
    %cst_9 = arith.constant dense<0.000000e+00> : vector<8xf32>
    %9 = vector.multi_reduction <add>, %6, %cst_9 [1] : vector<8x256xf32> to vector<8xf32>
    %10 = vector.shape_cast %9 : vector<8xf32> to vector<8x1xf32>
    %cst_10 = arith.constant 2.560000e+02 : f32
    %11 = vector.broadcast %cst_10 : f32 to vector<8x1xf32>
    %12 = arith.divf %10, %11 : vector<8x1xf32>
    %13 = vector.broadcast %12 : vector<8x1xf32> to vector<8x256xf32>
    %14 = arith.subf %6, %13 : vector<8x256xf32>
    %15 = arith.mulf %14, %14 : vector<8x256xf32>
    %cst_11 = arith.constant dense<0.000000e+00> : vector<8xf32>
    %16 = vector.multi_reduction <add>, %15, %cst_11 [1] : vector<8x256xf32> to vector<8xf32>
    %17 = vector.shape_cast %16 : vector<8xf32> to vector<8x1xf32>
    %cst_12 = arith.constant 2.560000e+02 : f32
    %18 = vector.broadcast %cst_12 : f32 to vector<8x1xf32>
    %19 = arith.divf %17, %18 : vector<8x1xf32>
    %cst_13 = arith.constant 9.99999974E-6 : f32
    %20 = vector.broadcast %cst_13 : f32 to vector<8x1xf32>
    %21 = arith.addf %19, %20 : vector<8x1xf32>
    %22 = math.rsqrt %21 : vector<8x1xf32>
    %23 = vector.broadcast %22 : vector<8x1xf32> to vector<8x256xf32>
    %24 = arith.mulf %14, %23 : vector<8x256xf32>
    %25 = vector.broadcast %7 : vector<1x256xf32> to vector<8x256xf32>
    %26 = arith.mulf %24, %25 : vector<8x256xf32>
    %27 = vector.broadcast %8 : vector<1x256xf32> to vector<8x256xf32>
    %28 = arith.addf %26, %27 : vector<8x256xf32>
    %cst_14 = arith.constant 0.000000e+00 : f32
    %29 = vector.broadcast %cst_14 : f32 to vector<8x256xf32>
    %30 = arith.cmpf oge, %28, %29 : vector<8x256xf32>
    %cst_15 = arith.constant 0.00999999977 : f32
    %31 = vector.broadcast %cst_15 : f32 to vector<8x256xf32>
    %32 = arith.mulf %31, %28 : vector<8x256xf32>
    %33 = arith.select %30, %28, %32 : vector<8x256xi1>, vector<8x256xf32>
    %34 = arith.truncf %33 : vector<8x256xf32> to vector<8x256xbf16>
    %c0_16 = arith.constant 0 : index
    %c0_17 = arith.constant 0 : index
    %35 = vector.load %arg6[%c0_16, %c0_17] : memref<256x128xbf16, #tpu.memory_space<vmem>>, vector<256x128xbf16>
    %cst_18 = arith.constant dense<0.000000e+00> : vector<8x128xf32>
    %36 = tpu.matmul %34, %35, %cst_18 {dimension_numbers = #tpu.dot_dimension_numbers<[1], [0], [0], [1], [0, 0, 1, 1], [], []>} : vector<8x256xbf16>, vector<256x128xbf16>, vector<8x128xf32> -> vector<8x128xf32>
    %c0_19 = arith.constant 0 : index
    %c0_20 = arith.constant 0 : index
    %37 = vector.load %arg7[%c0_19, %c0_20] : memref<1x128xf32, #tpu.memory_space<vmem>>, vector<1x128xf32>
    %38 = vector.broadcast %37 : vector<1x128xf32> to vector<8x128xf32>
    %39 = arith.addf %36, %38 : vector<8x128xf32>
    %c0_21 = arith.constant 0 : index
    %c0_22 = arith.constant 0 : index
    %40 = vector.load %arg8[%c0_21, %c0_22] : memref<1x128xf32, #tpu.memory_space<vmem>>, vector<1x128xf32>
    %c0_23 = arith.constant 0 : index
    %c0_24 = arith.constant 0 : index
    %41 = vector.load %arg9[%c0_23, %c0_24] : memref<1x128xf32, #tpu.memory_space<vmem>>, vector<1x128xf32>
    %cst_25 = arith.constant dense<0.000000e+00> : vector<8xf32>
    %42 = vector.multi_reduction <add>, %39, %cst_25 [1] : vector<8x128xf32> to vector<8xf32>
    %43 = vector.shape_cast %42 : vector<8xf32> to vector<8x1xf32>
    %cst_26 = arith.constant 1.280000e+02 : f32
    %44 = vector.broadcast %cst_26 : f32 to vector<8x1xf32>
    %45 = arith.divf %43, %44 : vector<8x1xf32>
    %46 = vector.broadcast %45 : vector<8x1xf32> to vector<8x128xf32>
    %47 = arith.subf %39, %46 : vector<8x128xf32>
    %48 = arith.mulf %47, %47 : vector<8x128xf32>
    %cst_27 = arith.constant dense<0.000000e+00> : vector<8xf32>
    %49 = vector.multi_reduction <add>, %48, %cst_27 [1] : vector<8x128xf32> to vector<8xf32>
    %50 = vector.shape_cast %49 : vector<8xf32> to vector<8x1xf32>
    %cst_28 = arith.constant 1.280000e+02 : f32
    %51 = vector.broadcast %cst_28 : f32 to vector<8x1xf32>
    %52 = arith.divf %50, %51 : vector<8x1xf32>
    %cst_29 = arith.constant 9.99999974E-6 : f32
    %53 = vector.broadcast %cst_29 : f32 to vector<8x1xf32>
    %54 = arith.addf %52, %53 : vector<8x1xf32>
    %55 = math.rsqrt %54 : vector<8x1xf32>
    %56 = vector.broadcast %55 : vector<8x1xf32> to vector<8x128xf32>
    %57 = arith.mulf %47, %56 : vector<8x128xf32>
    %58 = vector.broadcast %40 : vector<1x128xf32> to vector<8x128xf32>
    %59 = arith.mulf %57, %58 : vector<8x128xf32>
    %60 = vector.broadcast %41 : vector<1x128xf32> to vector<8x128xf32>
    %61 = arith.addf %59, %60 : vector<8x128xf32>
    %cst_30 = arith.constant 0.000000e+00 : f32
    %62 = vector.broadcast %cst_30 : f32 to vector<8x128xf32>
    %63 = arith.cmpf oge, %61, %62 : vector<8x128xf32>
    %cst_31 = arith.constant 0.00999999977 : f32
    %64 = vector.broadcast %cst_31 : f32 to vector<8x128xf32>
    %65 = arith.mulf %64, %61 : vector<8x128xf32>
    %66 = arith.select %63, %61, %65 : vector<8x128xi1>, vector<8x128xf32>
    %67 = arith.truncf %66 : vector<8x128xf32> to vector<8x128xbf16>
    %c0_32 = arith.constant 0 : index
    %c0_33 = arith.constant 0 : index
    %68 = vector.load %arg10[%c0_32, %c0_33] : memref<128x128xbf16, #tpu.memory_space<vmem>>, vector<128x128xbf16>
    %cst_34 = arith.constant dense<0.000000e+00> : vector<8x128xf32>
    %69 = tpu.matmul %67, %68, %cst_34 {dimension_numbers = #tpu.dot_dimension_numbers<[1], [0], [0], [1], [0, 0, 1, 1], [], []>} : vector<8x128xbf16>, vector<128x128xbf16>, vector<8x128xf32> -> vector<8x128xf32>
    %c0_35 = arith.constant 0 : index
    %c0_36 = arith.constant 0 : index
    %70 = vector.load %arg11[%c0_35, %c0_36] : memref<1x128xf32, #tpu.memory_space<vmem>>, vector<1x128xf32>
    %71 = vector.broadcast %70 : vector<1x128xf32> to vector<8x128xf32>
    %72 = arith.addf %69, %71 : vector<8x128xf32>
    %73 = arith.truncf %72 : vector<8x128xf32> to vector<8x128xbf16>
    %c0_37 = arith.constant 0 : index
    %c0_38 = arith.constant 0 : index
    %74 = vector.load %arg12[%c0_37, %c0_38] : memref<8x128xbf16, #tpu.memory_space<vmem>>, vector<8x128xbf16>
    tpu.vector_store %arg12[%c0_37, %c0_38], %73 {strides = array<i32>} : memref<8x128xbf16, #tpu.memory_space<vmem>>, vector<8x128xbf16>,
    return
  }
  func.func @transform_0(%arg0: i32) -> (i32, i32) {
    %c0_i32 = arith.constant 0 : i32
    %c0_i32_0 = arith.constant 0 : i32
    return %arg0, %c0_i32 : i32, i32
  }
  func.func @transform_1(%arg0: i32) -> (i32, i32) {
    %c0_i32 = arith.constant 0 : i32
    %c0_i32_0 = arith.constant 0 : i32
    %c0_i32_1 = arith.constant 0 : i32
    return %c0_i32, %c0_i32_0 : i32, i32
  }
  func.func @transform_2(%arg0: i32) -> (i32, i32) {
    %c0_i32 = arith.constant 0 : i32
    %c0_i32_0 = arith.constant 0 : i32
    %c0_i32_1 = arith.constant 0 : i32
    return %c0_i32, %c0_i32_0 : i32, i32
  }
  func.func @transform_3(%arg0: i32) -> (i32, i32) {
    %c0_i32 = arith.constant 0 : i32
    %c0_i32_0 = arith.constant 0 : i32
    %c0_i32_1 = arith.constant 0 : i32
    return %c0_i32, %c0_i32_0 : i32, i32
  }
  func.func @transform_4(%arg0: i32) -> (i32, i32) {
    %c0_i32 = arith.constant 0 : i32
    %c0_i32_0 = arith.constant 0 : i32
    %c0_i32_1 = arith.constant 0 : i32
    return %c0_i32, %c0_i32_0 : i32, i32
  }
  func.func @transform_5(%arg0: i32) -> (i32, i32) {
    %c0_i32 = arith.constant 0 : i32
    %c0_i32_0 = arith.constant 0 : i32
    %c0_i32_1 = arith.constant 0 : i32
    return %c0_i32, %c0_i32_0 : i32, i32
  }
  func.func @transform_6(%arg0: i32) -> (i32, i32) {
    %c0_i32 = arith.constant 0 : i32
    %c0_i32_0 = arith.constant 0 : i32
    %c0_i32_1 = arith.constant 0 : i32
    return %c0_i32, %c0_i32_0 : i32, i32
  }
  func.func @transform_7(%arg0: i32) -> (i32, i32) {
    %c0_i32 = arith.constant 0 : i32
    %c0_i32_0 = arith.constant 0 : i32
    %c0_i32_1 = arith.constant 0 : i32
    return %c0_i32, %c0_i32_0 : i32, i32
  }
  func.func @transform_8(%arg0: i32) -> (i32, i32) {
    %c0_i32 = arith.constant 0 : i32
    %c0_i32_0 = arith.constant 0 : i32
    %c0_i32_1 = arith.constant 0 : i32
    return %c0_i32, %c0_i32_0 : i32, i32
  }
  func.func @transform_9(%arg0: i32) -> (i32, i32) {
    %c0_i32 = arith.constant 0 : i32
    %c0_i32_0 = arith.constant 0 : i32
    %c0_i32_1 = arith.constant 0 : i32
    return %c0_i32, %c0_i32_0 : i32, i32
  }
  func.func @transform_10(%arg0: i32) -> (i32, i32) {
    %c0_i32 = arith.constant 0 : i32
    %c0_i32_0 = arith.constant 0 : i32
    %c0_i32_1 = arith.constant 0 : i32
    return %c0_i32, %c0_i32_0 : i32, i32
  }
  func.func @transform_11(%arg0: i32) -> (i32, i32) {
    %c0_i32 = arith.constant 0 : i32
    %c0_i32_0 = arith.constant 0 : i32
    return %arg0, %c0_i32 : i32, i32
  }
}

</mosaic_0001>

<llo_original>
// kernel: tpu_custom_call.1
$region0: #{tpu_custom_call.1}
  #allocation0 [shape = 'u32[]', space=smem, size = 0x4, offset = 0x4, fixed_abs, tag = 'smem constant byte address 0x4 - core index']
  #allocation1 [shape = 'u32[144,128]{1,0:T(1,128)}', space=vmem, size = 0x12000, scoped, tag = 'internal scratch']
  %s0 = inlined_call_operand.hbm [shape: f32[8,32], index: 0, kind: input, shape index: {}]
  %s1 = inlined_call_operand.hbm [shape: bf16[32,256], index: 1, kind: input, shape index: {}]
  %s2 = inlined_call_operand.vmem [shape: f32[1,256], index: 2, kind: input, shape index: {}]
  %s3 = inlined_call_operand.vmem [shape: f32[1,256], index: 3, kind: input, shape index: {}]
  %s4 = inlined_call_operand.vmem [shape: f32[1,256], index: 4, kind: input, shape index: {}]
  %s5 = inlined_call_operand.hbm [shape: bf16[256,128], index: 5, kind: input, shape index: {}]
  %s6 = inlined_call_operand.vmem [shape: f32[1,128], index: 6, kind: input, shape index: {}]
  %s7 = inlined_call_operand.vmem [shape: f32[1,128], index: 7, kind: input, shape index: {}]
  %s8 = inlined_call_operand.vmem [shape: f32[1,128], index: 8, kind: input, shape index: {}]
  %s9 = inlined_call_operand.hbm [shape: bf16[128,128], index: 9, kind: input, shape index: {}]
  %s10 = inlined_call_operand.vmem [shape: f32[1,128], index: 10, kind: input, shape index: {}]
  %s11 = inlined_call_operand.hbm [shape: bf16[8,128], index: 11, kind: output, shape index: {}]
  %s12 = sld [smem:[#allocation0]]
  $region70: #{tpu_custom_call.1} parent=0
    _
  %s14 = ssub.s32 1, %s12
  %s15 = scalar_select 0, %s14, %s12
  $region1: #{tpu_custom_call.1} parent=0
    #allocation2 [shape = 'u8[4096]{0}', space=vmem, size = 0x1000, scoped, tag = 'input window, operand 0, single buffered']
    #allocation3 [shape = 's32[1]{0}', space=sflag, size = 0x4, scoped, tag = 'scoped memory for tpu_custom_call.1']
    #allocation4 [shape = 's32[1]{0}', space=sflag, size = 0x4, scoped, tag = 'scoped memory for tpu_custom_call.1']
    #allocation5 [shape = 'u8[16384]{0}', space=vmem, size = 0x4000, scoped, tag = 'input window, operand 1, single buffered']
    #allocation6 [shape = 's32[1]{0}', space=sflag, size = 0x4, scoped, tag = 'scoped memory for tpu_custom_call.1']
    #allocation7 [shape = 'u8[65536]{0}', space=vmem, size = 0x10000, scoped, tag = 'input window, operand 5, single buffered']
    #allocation8 [shape = 'u8[32768]{0}', space=vmem, size = 0x8000, scoped, tag = 'input window, operand 9, single buffered']
    #allocation9 [shape = 's32[1]{0}', space=sflag, size = 0x4, scoped, tag = 'scoped memory for tpu_custom_call.1']
    #allocation10 [shape = 'u8[2048]{0}', space=vmem, size = 0x800, scoped, tag = 'output window, operand 0, single buffered']
    %16 = vsyncpa [#allocation3], 0
    %17 = vsyncpa [#allocation6], 0
    %18 = vsyncpa [#allocation9], 0
    %19 = vsyncpa [#allocation4], 0
    // Predicated region
    $region2: #{tpu_custom_call.1} parent=1 // pred_check
      _
    $region3: #{tpu_custom_call.1} parent=1 // pred_check_branch
      %21 = sbr.rel (0) target = $region5
    $region4: #{tpu_custom_call.1} parent=1 // pred_region
      %s23 = ssub.s32 128, 128
      %24 = vsyncadd [#allocation3], %s23
      %s26 = sshll.u32 [#allocation2], 4
      %s27 = int_to_ptr.vmem [resolvable:$true] %s26
      %29 = dma.hbm_to_vmem [thread:$0]  %s0, 128, %s27, [#allocation3]
    $region5: #{tpu_custom_call.1} parent=1 // pred_fallthru
      _
    // Predicated region
    $region6: #{tpu_custom_call.1} parent=1 // pred_check
      _
    $region7: #{tpu_custom_call.1} parent=1 // pred_check_branch
      %31 = sbr.rel (0) target = $region9
    $region8: #{tpu_custom_call.1} parent=1 // pred_region
      %s33 = ssub.s32 512, 512
      %34 = vsyncadd [#allocation6], %s33
      %s35 = sshll.u32 [#allocation5], 4
      %s36 = int_to_ptr.vmem [resolvable:$true] %s35
      %41 = dma.hbm_to_vmem [thread:$0]  %s1, 512, %s36, [#allocation6], 128, 128, 8
    $region9: #{tpu_custom_call.1} parent=1 // pred_fallthru
      _
    // Predicated region
    $region10: #{tpu_custom_call.1} parent=1 // pred_check
      _
    $region11: #{tpu_custom_call.1} parent=1 // pred_check_branch
      %43 = sbr.rel (0) target = $region13
    $region12: #{tpu_custom_call.1} parent=1 // pred_region
      _
    $region13: #{tpu_custom_call.1} parent=1 // pred_fallthru
      _
    // Predicated region
    $region14: #{tpu_custom_call.1} parent=1 // pred_check
      _
    $region15: #{tpu_custom_call.1} parent=1 // pred_check_branch
      %45 = sbr.rel (0) target = $region17
    $region16: #{tpu_custom_call.1} parent=1 // pred_region
      _
    $region17: #{tpu_custom_call.1} parent=1 // pred_fallthru
      _
    // Predicated region
    $region18: #{tpu_custom_call.1} parent=1 // pred_check
      _
    $region19: #{tpu_custom_call.1} parent=1 // pred_check_branch
      %47 = sbr.rel (0) target = $region21
    $region20: #{tpu_custom_call.1} parent=1 // pred_region
      _
    $region21: #{tpu_custom_call.1} parent=1 // pred_fallthru
      _
    // Predicated region
    $region22: #{tpu_custom_call.1} parent=1 // pred_check
      _
    $region23: #{tpu_custom_call.1} parent=1 // pred_check_branch
      %49 = sbr.rel (0) target = $region25
    $region24: #{tpu_custom_call.1} parent=1 // pred_region
      %s51 = ssub.s32 2048, 2048
      %52 = vsyncadd [#allocation6], %s51
      %s53 = sshll.u32 [#allocation7], 4
      %s54 = int_to_ptr.vmem [resolvable:$true] %s53
      %59 = dma.hbm_to_vmem [thread:$0]  %s5, 2048, %s54, [#allocation6], 64, 64, 4
    $region25: #{tpu_custom_call.1} parent=1 // pred_fallthru
      _
    // Predicated region
    $region26: #{tpu_custom_call.1} parent=1 // pred_check
      _
    $region27: #{tpu_custom_call.1} parent=1 // pred_check_branch
      %61 = sbr.rel (0) target = $region29
    $region28: #{tpu_custom_call.1} parent=1 // pred_region
      _
    $region29: #{tpu_custom_call.1} parent=1 // pred_fallthru
      _
    // Predicated region
    $region30: #{tpu_custom_call.1} parent=1 // pred_check
      _
    $region31: #{tpu_custom_call.1} parent=1 // pred_check_branch
      %63 = sbr.rel (0) target = $region33
    $region32: #{tpu_custom_call.1} parent=1 // pred_region
      _
    $region33: #{tpu_custom_call.1} parent=1 // pred_fallthru
      _
    // Predicated region
    $region34: #{tpu_custom_call.1} parent=1 // pred_check
      _
    $region35: #{tpu_custom_call.1} parent=1 // pred_check_branch
      %65 = sbr.rel (0) target = $region37
    $region36: #{tpu_custom_call.1} parent=1 // pred_region
      _
    $region37: #{tpu_custom_call.1} parent=1 // pred_fallthru
      _
    // Predicated region
    $region38: #{tpu_custom_call.1} parent=1 // pred_check
      _
    $region39: #{tpu_custom_call.1} parent=1 // pred_check_branch
      %67 = sbr.rel (0) target = $region41
    $region40: #{tpu_custom_call.1} parent=1 // pred_region
      %s69 = ssub.s32 1024, 1024
      %70 = vsyncadd [#allocation9], %s69
      %s71 = sshll.u32 [#allocation8], 4
      %s72 = int_to_ptr.vmem [resolvable:$true] %s71
      %77 = dma.hbm_to_vmem [thread:$0]  %s9, 1024, %s72, [#allocation9], 64, 64, 4
    $region41: #{tpu_custom_call.1} parent=1 // pred_fallthru
      _
    // Predicated region
    $region42: #{tpu_custom_call.1} parent=1 // pred_check
      _
    $region43: #{tpu_custom_call.1} parent=1 // pred_check_branch
      %79 = sbr.rel (0) target = $region45
    $region44: #{tpu_custom_call.1} parent=1 // pred_region
      _
    $region45: #{tpu_custom_call.1} parent=1 // pred_fallthru
      _
    // Predicated region
    $region46: #{tpu_custom_call.1} parent=1 // pred_check
      _
    $region47: #{tpu_custom_call.1} parent=1 // pred_check_branch
      %81 = sbr.rel (0) target = $region49
    $region48: #{tpu_custom_call.1} parent=1 // pred_region
      %82 = dma.done [#allocation3], 128
    $region49: #{tpu_custom_call.1} parent=1 // pred_fallthru
      _
    // Predicated region
    $region50: #{tpu_custom_call.1} parent=1 // pred_check
      _
    $region51: #{tpu_custom_call.1} parent=1 // pred_check_branch
      %84 = sbr.rel (0) target = $region53
    $region52: #{tpu_custom_call.1} parent=1 // pred_region
      %85 = dma.done [#allocation6], 512
    $region53: #{tpu_custom_call.1} parent=1 // pred_fallthru
      _
    // Predicated region
    $region54: #{tpu_custom_call.1} parent=1 // pred_check
      _
    $region55: #{tpu_custom_call.1} parent=1 // pred_check_branch
      %87 = sbr.rel (0) target = $region57
    $region56: #{tpu_custom_call.1} parent=1 // pred_region
      %88 = dma.done [#allocation6], 2048
    $region57: #{tpu_custom_call.1} parent=1 // pred_fallthru
      _
    // Predicated region
    $region58: #{tpu_custom_call.1} parent=1 // pred_check
      _
    $region59: #{tpu_custom_call.1} parent=1 // pred_check_branch
      %90 = sbr.rel (0) target = $region61
    $region60: #{tpu_custom_call.1} parent=1 // pred_region
      %91 = dma.done [#allocation9], 1024
    $region61: #{tpu_custom_call.1} parent=1 // pred_fallthru
      _
    %v93 = vld [vmem:[#allocation2] sm:$0xff]
    %v94 = vpack.c.bf16 %v93, %v93
    %v95 = vld [vmem:[#allocation5] sm:$0xff]
    %v96 = vld [vmem:[#allocation5 + $0x8] sm:$0xff]
    %v97 = vld [vmem:[#allocation5 + $0x10] sm:$0xff]
    %v98 = vld [vmem:[#allocation5 + $0x18] sm:$0xff]
    %v99 = vld [vmem:[%s2] sm:$0x3]
    %v101 = vlaneseq
    %v102 = vshrl.u32 %v101, 7
    %v103 = vsub.s32 0, %v102
    %v104 = vrot.slane %v99, %v103
    %v105 = vlaneseq
    %v106 = vshrl.u32 %v105, 7
    %v107 = vsub.s32 1, %v106
    %v108 = vrot.slane %v99, %v107
    %v115 = vunpack.c.l.b16 %v95
    %v116 = vunpack.c.h.b16 %v95
    %v117 = vunpack.c.l.b16 %v96
    %v118 = vunpack.c.h.b16 %v96
    %v119 = vunpack.c.l.b16 %v97
    %v120 = vunpack.c.h.b16 %v97
    %v121 = vunpack.c.l.b16 %v98
    %v122 = vunpack.c.h.b16 %v98
    %v123 = vpack.c.b16 %v117, %v115
    %v124 = vpack.c.b16 %v118, %v116
    %v125 = vpack.c.b16 %v121, %v119
    %v126 = vpack.c.b16 %v122, %v120
    %vm131 = vcmask 261120
    %v133 = vsel %vm131, %v94, 0
    %135 = vmatprep.subr.bf16.mxu0 %v124
    %136 = vmatpush1.bf16.msra.mxu0 %v123
    %137 = vmatprep.subr.bf16.mxu0 %v126
    %138 = vmatpush1.bf16.msra.mxu0 %v125
    %139 = vmatprep.subr.bf16.mxu0 0
    %140 = vmatpush1.bf16.msra.mxu0 0
    %141 = vmatprep.subr.bf16.mxu0 0
    %142 = vmatpush1.bf16.msra.mxu0 0
    %143 = vmatprep.subr.bf16.mxu0 0
    %144 = vmatpush1.bf16.msra.mxu0 0
    %145 = vmatprep.subr.bf16.mxu0 0
    %146 = vmatpush1.bf16.msra.mxu0 0
    %147 = vmatprep.subr.bf16.mxu0 0
    %148 = vmatpush1.bf16.msra.mxu0 0
    %149 = vmatprep.subr.bf16.mxu0 0
    %150 = vmatpush1.bf16.msra.mxu0 0
    %151 = vmatprep.subr.bf16.mxu0 0
    %152 = vmatpush1.bf16.msra.mxu0 0
    %153 = vmatprep.subr.bf16.mxu0 0
    %154 = vmatpush1.bf16.msra.mxu0 0
    %155 = vmatprep.subr.bf16.mxu0 0
    %156 = vmatpush1.bf16.msra.mxu0 0
    %157 = vmatprep.subr.bf16.mxu0 0
    %158 = vmatpush1.bf16.msra.mxu0 0
    %159 = vmatprep.subr.bf16.mxu0 0
    %160 = vmatpush1.bf16.msra.mxu0 0
    %161 = vmatprep.subr.bf16.mxu0 0
    %162 = vmatpush1.bf16.msra.mxu0 0
    %163 = vmatprep.subr.bf16.mxu0 0
    %164 = vmatpush1.bf16.msra.mxu0 0
    %165 = vmatprep.subr.bf16.mxu0 0
    %166 = vmatpush1.bf16.msra.mxu0 0
    %167 = vmatprep.mubr.bf16.mxu0 0
    %168 = vmatmul.mubr.bf16.gmra.mrb[0].mxu0 %v133
    %v169 = vpop.f32.mrb[0].mxu0
    %v170 = vadd.f32 %v104, %v169
    %v171 = vpop.f32.mrb[0].mxu0
    %v172 = vadd.f32 %v108, %v171
    %v173 = vpop.f32.mrb[0].mxu0
    %v174 = vpop.f32.mrb[0].mxu0
    %175 = vdwg.mxu0
    %v176 = vld [vmem:[%s3] sm:$0x3]
    %v177 = vld [vmem:[%s4] sm:$0x3]
    %v178 = vadd.f32 %v170, %v172
    %179 = vadd.xlane.f32.xlu0 %v178
    %v180 = vpop.xlane.xlu0 %179
    %v181 = vrcp.pop 256.0
    %v182 = vmul.f32 %v180, %v181
    %v183 = vsub.f32 %v170, %v182
    %v184 = vsub.f32 %v172, %v182
    %v185 = vmul.f32 %v183, %v183
    %v186 = vmul.f32 %v184, %v184
    %v187 = vadd.f32 %v185, %v186
    %188 = vadd.xlane.f32.xlu0 %v187
    %v189 = vpop.xlane.xlu0 %188
    %v190 = vmul.f32 %v189, %v181
    %v191 = vadd.f32 %v190, 1e-05
    %v192 = vrsqrt.pop %v191
    %v193 = vmul.f32 %v183, %v192
    %v194 = vmul.f32 %v184, %v192
    %v196 = vlaneseq
    %v197 = vshrl.u32 %v196, 7
    %v198 = vsub.s32 0, %v197
    %v199 = vrot.slane %v176, %v198
    %v200 = vlaneseq
    %v201 = vshrl.u32 %v200, 7
    %v202 = vsub.s32 1, %v201
    %v203 = vrot.slane %v176, %v202
    %v206 = vmul.f32 %v193, %v199
    %v207 = vmul.f32 %v194, %v203
    %v209 = vlaneseq
    %v210 = vshrl.u32 %v209, 7
    %v211 = vsub.s32 0, %v210
    %v212 = vrot.slane %v177, %v211
    %v213 = vlaneseq
    %v214 = vshrl.u32 %v213, 7
    %v215 = vsub.s32 1, %v214
    %v216 = vrot.slane %v177, %v215
    %v219 = vadd.f32 %v206, %v212
    %v220 = vadd.f32 %v207, %v216
    %vm221 = vcmp.ge.f32.partialorder %v219, 0.0
    %vm222 = vcmp.ge.f32.partialorder %v220, 0.0
    %v223 = vmul.f32 %v219, 0.01
    %v224 = vmul.f32 %v220, 0.01
    %v225 = vsel %vm221, %v219, %v223
    %v226 = vsel %vm222, %v220, %v224
    %v227 = vpack.c.bf16 %v225, %v225
    %v228 = vpack.c.bf16 %v226, %v226
    %v229 = vld [vmem:[#allocation7] sm:$0xf]
    %v230 = vld [vmem:[#allocation7 + $0x4] sm:$0xf]
    %v231 = vld [vmem:[#allocation7 + $0x8] sm:$0xf]
    %v232 = vld [vmem:[#allocation7 + $0xc] sm:$0xf]
    %v233 = vld [vmem:[#allocation7 + $0x10] sm:$0xf]
    %v234 = vld [vmem:[#allocation7 + $0x14] sm:$0xf]
    %v235 = vld [vmem:[#allocation7 + $0x18] sm:$0xf]
    %v236 = vld [vmem:[#allocation7 + $0x1c] sm:$0xf]
    %v237 = vld [vmem:[#allocation7 + $0x20] sm:$0xf]
    %v238 = vld [vmem:[#allocation7 + $0x24] sm:$0xf]
    %v239 = vld [vmem:[#allocation7 + $0x28] sm:$0xf]
    %v240 = vld [vmem:[#allocation7 + $0x2c] sm:$0xf]
    %v241 = vld [vmem:[#allocation7 + $0x30] sm:$0xf]
    %v242 = vld [vmem:[#allocation7 + $0x34] sm:$0xf]
    %v243 = vld [vmem:[#allocation7 + $0x38] sm:$0xf]
    %v244 = vld [vmem:[#allocation7 + $0x3c] sm:$0xf]
    %v245 = vld [vmem:[#allocation7 + $0x40] sm:$0xf]
    %v246 = vld [vmem:[#allocation7 + $0x44] sm:$0xf]
    %v247 = vld [vmem:[#allocation7 + $0x48] sm:$0xf]
    %v248 = vld [vmem:[#allocation7 + $0x4c] sm:$0xf]
    %v249 = vld [vmem:[#allocation7 + $0x50] sm:$0xf]
    %v250 = vld [vmem:[#allocation7 + $0x54] sm:$0xf]
    %v251 = vld [vmem:[#allocation7 + $0x58] sm:$0xf]
    %v252 = vld [vmem:[#allocation7 + $0x5c] sm:$0xf]
    %v253 = vld [vmem:[#allocation7 + $0x60] sm:$0xf]
    %v254 = vld [vmem:[#allocation7 + $0x64] sm:$0xf]
    %v255 = vld [vmem:[#allocation7 + $0x68] sm:$0xf]
    %v256 = vld [vmem:[#allocation7 + $0x6c] sm:$0xf]
    %v257 = vld [vmem:[#allocation7 + $0x70] sm:$0xf]
    %v258 = vld [vmem:[#allocation7 + $0x74] sm:$0xf]
    %v259 = vld [vmem:[#allocation7 + $0x78] sm:$0xf]
    %v260 = vld [vmem:[#allocation7 + $0x7c] sm:$0xf]
    %v261 = vld [vmem:[%s6] sm:$0x1]
    %v263 = vlaneseq
    %v264 = vshrl.u32 %v263, 7
    %v265 = vsub.s32 0, %v264
    %v266 = vrot.slane %v261, %v265
    %v300 = vunpack.c.l.b16 %v229
    %v301 = vunpack.c.l.b16 %v230
    %v302 = vunpack.c.l.b16 %v231
    %v303 = vunpack.c.l.b16 %v232
    %v304 = vunpack.c.l.b16 %v233
    %v305 = vunpack.c.l.b16 %v234
    %v306 = vunpack.c.l.b16 %v235
    %v307 = vunpack.c.l.b16 %v236
    %v308 = vunpack.c.l.b16 %v237
    %v309 = vunpack.c.l.b16 %v238
    %v310 = vunpack.c.l.b16 %v239
    %v311 = vunpack.c.l.b16 %v240
    %v312 = vunpack.c.l.b16 %v241
    %v313 = vunpack.c.l.b16 %v242
    %v314 = vunpack.c.l.b16 %v243
    %v315 = vunpack.c.l.b16 %v244
    %v316 = vunpack.c.l.b16 %v245
    %v317 = vunpack.c.l.b16 %v246
    %v318 = vunpack.c.l.b16 %v247
    %v319 = vunpack.c.l.b16 %v248
    %v320 = vunpack.c.l.b16 %v249
    %v321 = vunpack.c.l.b16 %v250
    %v322 = vunpack.c.l.b16 %v251
    %v323 = vunpack.c.l.b16 %v252
    %v324 = vunpack.c.l.b16 %v253
    %v325 = vunpack.c.l.b16 %v254
    %v326 = vunpack.c.l.b16 %v255
    %v327 = vunpack.c.l.b16 %v256
    %v328 = vunpack.c.l.b16 %v257
    %v329 = vunpack.c.l.b16 %v258
    %v330 = vunpack.c.l.b16 %v259
    %v331 = vunpack.c.l.b16 %v260
    %v332 = vpack.c.b16 %v301, %v300
    %v333 = vpack.c.b16 %v303, %v302
    %v334 = vpack.c.b16 %v305, %v304
    %v335 = vpack.c.b16 %v307, %v306
    %v336 = vpack.c.b16 %v309, %v308
    %v337 = vpack.c.b16 %v311, %v310
    %v338 = vpack.c.b16 %v313, %v312
    %v339 = vpack.c.b16 %v315, %v314
    %v340 = vpack.c.b16 %v317, %v316
    %v341 = vpack.c.b16 %v319, %v318
    %v342 = vpack.c.b16 %v321, %v320
    %v343 = vpack.c.b16 %v323, %v322
    %v344 = vpack.c.b16 %v325, %v324
    %v345 = vpack.c.b16 %v327, %v326
    %v346 = vpack.c.b16 %v329, %v328
    %v347 = vpack.c.b16 %v331, %v330
    %364 = vmatprep.subr.bf16.mxu0 0
    %365 = vmatpush1.bf16.msra.mxu0 %v332
    %366 = vmatprep.subr.bf16.mxu0 0
    %367 = vmatpush1.bf16.msra.mxu0 %v333
    %368 = vmatprep.subr.bf16.mxu0 0
    %369 = vmatpush1.bf16.msra.mxu0 %v334
    %370 = vmatprep.subr.bf16.mxu0 0
    %371 = vmatpush1.bf16.msra.mxu0 %v335
    %372 = vmatprep.subr.bf16.mxu0 0
    %373 = vmatpush1.bf16.msra.mxu0 %v336
    %374 = vmatprep.subr.bf16.mxu0 0
    %375 = vmatpush1.bf16.msra.mxu0 %v337
    %376 = vmatprep.subr.bf16.mxu0 0
    %377 = vmatpush1.bf16.msra.mxu0 %v338
    %378 = vmatprep.subr.bf16.mxu0 0
    %379 = vmatpush1.bf16.msra.mxu0 %v339
    %380 = vmatprep.subr.bf16.mxu0 0
    %381 = vmatpush1.bf16.msra.mxu0 %v340
    %382 = vmatprep.subr.bf16.mxu0 0
    %383 = vmatpush1.bf16.msra.mxu0 %v341
    %384 = vmatprep.subr.bf16.mxu0 0
    %385 = vmatpush1.bf16.msra.mxu0 %v342
    %386 = vmatprep.subr.bf16.mxu0 0
    %387 = vmatpush1.bf16.msra.mxu0 %v343
    %388 = vmatprep.subr.bf16.mxu0 0
    %389 = vmatpush1.bf16.msra.mxu0 %v344
    %390 = vmatprep.subr.bf16.mxu0 0
    %391 = vmatpush1.bf16.msra.mxu0 %v345
    %392 = vmatprep.subr.bf16.mxu0 0
    %393 = vmatpush1.bf16.msra.mxu0 %v346
    %394 = vmatprep.subr.bf16.mxu0 0
    %395 = vmatpush1.bf16.msra.mxu0 %v347
    %396 = vmatprep.mubr.bf16.mxu0 %v228
    %397 = vmatmul.mubr.bf16.gmra.mrb[0].mxu0 %v227
    %v398 = vpop.f32.mrb[0].mxu0
    %v399 = vadd.f32 %v266, %v398
    %v400 = vpop.f32.mrb[0].mxu0
    %v401 = vpop.f32.mrb[0].mxu0
    %v402 = vpop.f32.mrb[0].mxu0
    %403 = vdwg.mxu0
    %v404 = vld [vmem:[%s7] sm:$0x1]
    %v405 = vld [vmem:[%s8] sm:$0x1]
    %406 = vadd.xlane.f32.xlu0 %v399
    %v407 = vpop.xlane.xlu0 %406
    %v408 = vrcp.pop 128.0
    %v409 = vmul.f32 %v407, %v408
    %v410 = vsub.f32 %v399, %v409
    %v411 = vmul.f32 %v410, %v410
    %412 = vadd.xlane.f32.xlu0 %v411
    %v413 = vpop.xlane.xlu0 %412
    %v414 = vmul.f32 %v413, %v408
    %v415 = vadd.f32 %v414, 1e-05
    %v416 = vrsqrt.pop %v415
    %v417 = vmul.f32 %v410, %v416
    %v419 = vlaneseq
    %v420 = vshrl.u32 %v419, 7
    %v421 = vsub.s32 0, %v420
    %v422 = vrot.slane %v404, %v421
    %v424 = vmul.f32 %v417, %v422
    %v426 = vlaneseq
    %v427 = vshrl.u32 %v426, 7
    %v428 = vsub.s32 0, %v427
    %v429 = vrot.slane %v405, %v428
    %v431 = vadd.f32 %v424, %v429
    %vm432 = vcmp.ge.f32.partialorder %v431, 0.0
    %v433 = vmul.f32 %v431, 0.01
    %v434 = vsel %vm432, %v431, %v433
    %v435 = vpack.c.bf16 %v434, %v434
    %v436 = vld [vmem:[#allocation8] sm:$0xf]
    %v437 = vld [vmem:[#allocation8 + $0x4] sm:$0xf]
    %v438 = vld [vmem:[#allocation8 + $0x8] sm:$0xf]
    %v439 = vld [vmem:[#allocation8 + $0xc] sm:$0xf]
    %v440 = vld [vmem:[#allocation8 + $0x10] sm:$0xf]
    %v441 = vld [vmem:[#allocation8 + $0x14] sm:$0xf]
    %v442 = vld [vmem:[#allocation8 + $0x18] sm:$0xf]
    %v443 = vld [vmem:[#allocation8 + $0x1c] sm:$0xf]
    %v444 = vld [vmem:[#allocation8 + $0x20] sm:$0xf]
    %v445 = vld [vmem:[#allocation8 + $0x24] sm:$0xf]
    %v446 = vld [vmem:[#allocation8 + $0x28] sm:$0xf]
    %v447 = vld [vmem:[#allocation8 + $0x2c] sm:$0xf]
    %v448 = vld [vmem:[#allocation8 + $0x30] sm:$0xf]
    %v449 = vld [vmem:[#allocation8 + $0x34] sm:$0xf]
    %v450 = vld [vmem:[#allocation8 + $0x38] sm:$0xf]
    %v451 = vld [vmem:[#allocation8 + $0x3c] sm:$0xf]
    %v452 = vld [vmem:[%s10] sm:$0x1]
    %v454 = vlaneseq
    %v455 = vshrl.u32 %v454, 7
    %v456 = vsub.s32 0, %v455
    %v457 = vrot.slane %v452, %v456
    %v475 = vunpack.c.l.b16 %v436
    %v476 = vunpack.c.l.b16 %v437
    %v477 = vunpack.c.l.b16 %v438
    %v478 = vunpack.c.l.b16 %v439
    %v479 = vunpack.c.l.b16 %v440
    %v480 = vunpack.c.l.b16 %v441
    %v481 = vunpack.c.l.b16 %v442
    %v482 = vunpack.c.l.b16 %v443
    %v483 = vunpack.c.l.b16 %v444
    %v484 = vunpack.c.l.b16 %v445
    %v485 = vunpack.c.l.b16 %v446
    %v486 = vunpack.c.l.b16 %v447
    %v487 = vunpack.c.l.b16 %v448
    %v488 = vunpack.c.l.b16 %v449
    %v489 = vunpack.c.l.b16 %v450
    %v490 = vunpack.c.l.b16 %v451
    %v491 = vpack.c.b16 %v476, %v475
    %v492 = vpack.c.b16 %v478, %v477
    %v493 = vpack.c.b16 %v480, %v479
    %v494 = vpack.c.b16 %v482, %v481
    %v495 = vpack.c.b16 %v484, %v483
    %v496 = vpack.c.b16 %v486, %v485
    %v497 = vpack.c.b16 %v488, %v487
    %v498 = vpack.c.b16 %v490, %v489
    %507 = vmatprep.subr.bf16.mxu0 0
    %508 = vmatpush1.bf16.msra.mxu0 %v491
    %509 = vmatprep.subr.bf16.mxu0 0
    %510 = vmatpush1.bf16.msra.mxu0 %v492
    %511 = vmatprep.subr.bf16.mxu0 0
    %512 = vmatpush1.bf16.msra.mxu0 %v493
    %513 = vmatprep.subr.bf16.mxu0 0
    %514 = vmatpush1.bf16.msra.mxu0 %v494
    %515 = vmatprep.subr.bf16.mxu0 0
    %516 = vmatpush1.bf16.msra.mxu0 %v495
    %517 = vmatprep.subr.bf16.mxu0 0
    %518 = vmatpush1.bf16.msra.mxu0 %v496
    %519 = vmatprep.subr.bf16.mxu0 0
    %520 = vmatpush1.bf16.msra.mxu0 %v497
    %521 = vmatprep.subr.bf16.mxu0 0
    %522 = vmatpush1.bf16.msra.mxu0 %v498
    %523 = vmatprep.subr.bf16.mxu0 0
    %524 = vmatpush1.bf16.msra.mxu0 0
    %525 = vmatprep.subr.bf16.mxu0 0
    %526 = vmatpush1.bf16.msra.mxu0 0
    %527 = vmatprep.subr.bf16.mxu0 0
    %528 = vmatpush1.bf16.msra.mxu0 0
    %529 = vmatprep.subr.bf16.mxu0 0
    %530 = vmatpush1.bf16.msra.mxu0 0
    %531 = vmatprep.subr.bf16.mxu0 0
    %532 = vmatpush1.bf16.msra.mxu0 0
    %533 = vmatprep.subr.bf16.mxu0 0
    %534 = vmatpush1.bf16.msra.mxu0 0
    %535 = vmatprep.subr.bf16.mxu0 0
    %536 = vmatpush1.bf16.msra.mxu0 0
    %537 = vmatprep.subr.bf16.mxu0 0
    %538 = vmatpush1.bf16.msra.mxu0 0
    %539 = vmatprep.mubr.bf16.mxu0 0
    %540 = vmatmul.mubr.bf16.gmra.mrb[0].mxu0 %v435
    %v541 = vpop.f32.mrb[0].mxu0
    %v542 = vadd.f32 %v457, %v541
    %v543 = vpop.f32.mrb[0].mxu0
    %v544 = vpop.f32.mrb[0].mxu0
    %v545 = vpop.f32.mrb[0].mxu0
    %546 = vdwg.mxu0
    %v547 = vpack.c.bf16 %v542, %v542
    %548 = vst [vmem:[#allocation10] sm:$0xf] %v547
    // Predicated region
    $region62: #{tpu_custom_call.1} parent=1 // pred_check
      _
    $region63: #{tpu_custom_call.1} parent=1 // pred_check_branch
      %550 = sbr.rel (0) target = $region65
    $region64: #{tpu_custom_call.1} parent=1 // pred_region
      %s552 = ssub.s32 64, 64
      %553 = vsyncadd [#allocation4], %s552
      %s555 = sshll.u32 [#allocation10], 4
      %s556 = int_to_ptr.vmem [resolvable:$true] %s555
      %558 = dma.vmem_to_hbm [thread:$0]  %s556, 64, %s11, [#allocation4]
    $region65: #{tpu_custom_call.1} parent=1 // pred_fallthru
      _
    // Predicated region
    $region66: #{tpu_custom_call.1} parent=1 // pred_check
      _
    $region67: #{tpu_custom_call.1} parent=1 // pred_check_branch
      %560 = sbr.rel (0) target = $region69
    $region68: #{tpu_custom_call.1} parent=1 // pred_region
      %561 = dma.done [#allocation4], 64
    $region69: #{tpu_custom_call.1} parent=1 // pred_fallthru
      _
    %562 = vsyncpa [#allocation3], 1
    %563 = vsyncpa [#allocation6], 1
    %564 = vsyncpa [#allocation9], 1
    %565 = vsyncpa [#allocation4], 1

</llo_original>
